<compile_context>
chip_gen: v7x
topology: tpu7x:2x2x1
jax: 0.10.0
libtpu: 0.0.40
codegen_flags: <defaults>
</compile_context>

<pallas_src>
import functools

import jax
import jax.numpy as jnp
from jax.experimental import pallas as pl
from jax.experimental.pallas import tpu as pltpu


def _patch_embed_kernel(patches_ref, w_ref, pos_ref, o_ref, *, tm, n_pos_blocks):
    # patches_ref: (tm, Kp) bf16 (streamed)
    # w_ref:       (Kp, Dp) bf16 (VMEM-resident)
    # pos_ref:     (Npad, Dp) f32 (VMEM-resident; pos_embed[1:] + conv bias, zero-padded)
    acc = jnp.dot(patches_ref[...], w_ref[...], preferred_element_type=jnp.float32)
    if n_pos_blocks == 1:
        pos = pos_ref[...]
    else:
        off = pl.multiple_of((pl.program_id(0) % n_pos_blocks) * tm, tm)
        pos = pos_ref[pl.ds(off, tm), :]
    o_ref[...] = (acc + pos).astype(o_ref.dtype)


def _block_spec(shape, index_map, buffers=None):
    """BlockSpec helper; requests explicit buffer depth when supported."""
    if buffers is None:
        return pl.BlockSpec(shape, index_map)
    try:
        return pl.BlockSpec(shape, index_map, pipeline_mode=pl.Buffered(buffers))
    except Exception:  # older/odd jax: fall back to default double-buffering
        return pl.BlockSpec(shape, index_map)


def _pick_tm(n_tokens, batch, max_tile=512):
    """Pick (tm, n_tokens_padded): tm a multiple of 16, padded tokens a multiple of tm."""
    n = n_tokens
    best = None
    t = 16
    while t <= min(n, max_tile):
        if n % t == 0:
            best = t
        t += 16
    if best is not None and best >= 64:
        tm, npad = best, n                      # exact divisor, no padding
    elif n <= max_tile:
        tm = ((n + 15) // 16) * 16              # one tile per image, pad to 16
        npad = tm
    else:
        tm = max_tile
        npad = ((n + tm - 1) // tm) * tm        # pad token axis up to tile multiple
    # v7x has two TensorCores; keep the "parallel" grid length >= 2 when possible.
    while batch * (npad // tm) < 2 and tm % 32 == 0:
        tm //= 2
    return tm, npad


def patch_project_pallas(patches, w_mat, pos_tab, tm, out_dtype=jnp.bfloat16):
    """patches: (M, Kp) bf16; w_mat: (Kp, Dp) bf16; pos_tab: (Npad, Dp) f32.

    Returns (M, Dp) = patches @ w_mat + pos_tab[row % Npad] in out_dtype."""
    M, Kp = patches.shape
    Kp2, Dp = w_mat.shape
    Npad = pos_tab.shape[0]
    assert Kp == Kp2 and M % tm == 0 and Npad % tm == 0 and M % Npad == 0
    n_pos_blocks = Npad // tm

    kernel = functools.partial(_patch_embed_kernel, tm=tm, n_pos_blocks=n_pos_blocks)

    out_isize = jnp.dtype(out_dtype).itemsize
    bytes_accessed = (patches.size * patches.dtype.itemsize
                      + w_mat.size * w_mat.dtype.itemsize
                      + pos_tab.size * pos_tab.dtype.itemsize
                      + M * Dp * out_isize)
    cost = pl.CostEstimate(flops=2 * M * Kp * Dp, transcendentals=0,
                           bytes_accessed=bytes_accessed)

    # Scoped-VMEM budget (count everything double-buffered to be conservative), with
    # 2x headroom; clamp to [16 MiB (v5e default), 48 MiB (under v7x physical)].
    per_step = (2 * tm * Kp * patches.dtype.itemsize
                + 2 * Kp * Dp * w_mat.dtype.itemsize
                + 2 * Npad * Dp * pos_tab.dtype.itemsize
                + 2 * tm * Dp * out_isize)
    vmem_limit = int(min(48 * 1024 * 1024, max(16 * 1024 * 1024, 2 * per_step)))

    return pl.pallas_call(
        kernel,
        out_shape=jax.ShapeDtypeStruct((M, Dp), out_dtype),
        grid_spec=pltpu.PrefetchScalarGridSpec(
            num_scalar_prefetch=0,
            grid=(M // tm,),
            in_specs=[
                _block_spec((tm, Kp), lambda i: (i, 0)),                # streamed patches
                _block_spec((Kp, Dp), lambda i: (0, 0), buffers=1),     # resident weight
                _block_spec((Npad, Dp), lambda i: (0, 0), buffers=1),   # resident pos+bias
            ],
            out_specs=pl.BlockSpec((tm, Dp), lambda i: (i, 0)),
        ),
        compiler_params=pltpu.CompilerParams(
            dimension_semantics=("parallel",),   # independent M-tiles: shard over TCs
            vmem_limit_bytes=vmem_limit),
        cost_estimate=cost,
    )(patches, w_mat, pos_tab)


def vit_embedding_forward(x, conv_w, conv_b, cls_token, pos_embed, patch_size,
                          max_tile=512, out_dtype=jnp.bfloat16):
    """x: (B, C, H, W) NCHW.  Returns (B, num_patches + 1, D) in out_dtype."""
    B, C, H, W = x.shape
    P = patch_size
    Hp, Wp = H // P, W // P
    N = Hp * Wp
    D = conv_w.shape[0]
    K = C * P * P

    tm, Npad = _pick_tm(N, B, max_tile)
    # Pad lane dims up to 128 only for tiny embed/contraction dims (avoids masked
    # output stores / wasted MXU lanes); production D=768, K=768 take the no-pad path.
    Dp = D if D >= 128 else 128
    Kp = K if K >= 128 else 128

    # ---- glue: extract non-overlapping patches, inner order (c, p, q), in bf16 ----
    xb = x.astype(jnp.bfloat16)
    patches = xb.reshape(B, C, Hp, P, Wp, P).transpose(0, 2, 4, 1, 3, 5)  # (B,Hp,Wp,C,P,P)
    patches = patches.reshape(B, N, K)
    # TODO(synk): fuse this relayout into the kernel to avoid the HBM-materialized copy.
    if Kp != K or Npad != N:
        patches = jnp.pad(patches, ((0, 0), (0, Npad - N), (0, Kp - K)))
    patches = patches.reshape(B * Npad, Kp)

    # conv weight (D, C, P, P) -> (K, D) -> zero-pad to (Kp, Dp), bf16 for the MXU.
    w_mat = conv_w.reshape(D, K).T.astype(jnp.bfloat16)
    if Kp != K or Dp != D:
        w_mat = jnp.pad(w_mat, ((0, Kp - K), (0, Dp - D)))

    # Fold conv bias into the per-patch positional table (VMEM-resident in the kernel).
    pos_tab = (pos_embed[0, 1:, :] + conv_b.reshape(1, D)).astype(jnp.float32)  # (N, D)
    if Npad != N or Dp != D:
        pos_tab = jnp.pad(pos_tab, ((0, Npad - N), (0, Dp - D)))

    # ---- Pallas hot path: projection matmul + (pos + bias) add, tiled over M ----
    tok = patch_project_pallas(patches, w_mat, pos_tab, tm, out_dtype=out_dtype)
    tok = tok.reshape(B, Npad, Dp)[:, :N, :D]

    # ---- glue: prepend class token (+ its positional embedding), in out_dtype ----
    cls = (cls_token + pos_embed[:, :1, :]).astype(out_dtype)   # (1, 1, D)
    cls = jnp.broadcast_to(cls, (B, 1, D))
    out = jnp.concatenate([cls, tok], axis=1)                   # (B, N+1, D)
    # TODO(synk): emit (B, N+1, D) directly from the kernel (dummy zero patch row) to
    #             drop this concat pass.
    # Dropout1D: identity at inference.  TODO(synk): training-mode dropout mask.
    return out


def _reference(x, conv_w, conv_b, cls_token, pos_embed, patch_size):
    """Pure-JAX f32 reference of the PyTorch forward (conv -> flatten -> cls -> +pos)."""
    conv = jax.lax.conv_general_dilated(
        x.astype(jnp.float32), conv_w.astype(jnp.float32),
        window_strides=(patch_size, patch_size), padding="VALID",
        dimension_numbers=("NCHW", "OIHW", "NCHW"))
    conv = conv + conv_b.reshape(1, -1, 1, 1)
    B, D, Hp, Wp = conv.shape
    tok = conv.reshape(B, D, Hp * Wp).transpose(0, 2, 1)        # (B, N, D)
    cls = jnp.broadcast_to(cls_token, (B, 1, D))
    out = jnp.concatenate([cls, tok], axis=1) + pos_embed
    return out


if __name__ == "__main__":
    # Small shapes consistent with the module: img=16, patch=4, in_chans=4, embed=32.
    B, C, IMG, P, D = 2, 4, 16, 4, 32
    N = (IMG // P) * (IMG // P)

    key = jax.random.PRNGKey(0)
    kx, kw, kb, kc, kp = jax.random.split(key, 5)

    x = jax.random.normal(kx, (B, C, IMG, IMG), dtype=jnp.float32)
    # Deterministic synthetic params (shapes from PatchEmbedding1D.__init__).
    conv_w = jax.random.normal(kw, (D, C, P, P), dtype=jnp.float32) * 0.02
    conv_b = jax.random.normal(kb, (D,), dtype=jnp.float32) * 0.02
    cls_token = jax.random.normal(kc, (1, 1, D), dtype=jnp.float32) * 0.02
    pos_embed = jax.random.normal(kp, (1, N + 1, D), dtype=jnp.float32) * 0.02

    out = vit_embedding_forward(x, conv_w, conv_b, cls_token, pos_embed, P)
    out = jax.block_until_ready(out)

    ref = _reference(x, conv_w, conv_b, cls_token, pos_embed, P)
    assert out.shape == (B, N + 1, D), out.shape
    # bf16 matmul inputs AND bf16 output (f32 accumulation) -> loose tolerance vs f32 ref.
    max_err = float(jnp.abs(out.astype(jnp.float32) - ref).max())
    assert jnp.allclose(out.astype(jnp.float32), ref, atol=2e-2, rtol=2e-2), max_err

    print("KERNEL_OK")
</pallas_src>

<mosaic_0001>
module attributes {stable_mosaic.version = 11 : i64} {
  func.func @_patch_embed_kernel(%arg0: i32, %arg1: memref<16x128xbf16, #tpu.memory_space<vmem>>, %arg2: memref<128x128xbf16, #tpu.memory_space<vmem>>, %arg3: memref<16x128xf32, #tpu.memory_space<vmem>>, %arg4: memref<16x128xbf16, #tpu.memory_space<vmem>>) attributes {dimension_semantics = [#tpu.dimension_semantics<parallel>], iteration_bounds = array<i64: 2>, scalar_prefetch = 0 : i64, scratch_operands = 0 : i64, tpu.core_type = #tpu.core_type<tc>, window_params = [{transform_indices = @transform_0, window_bounds = array<i64: 16, 128>}, {pipeline_mode = #tpu.pipeline_mode<synchronous>, transform_indices = @transform_1, window_bounds = array<i64: 128, 128>}, {pipeline_mode = #tpu.pipeline_mode<synchronous>, transform_indices = @transform_2, window_bounds = array<i64: 16, 128>}, {transform_indices = @transform_3, window_bounds = array<i64: 16, 128>}]} {
    %c0 = arith.constant 0 : index
    %c0_0 = arith.constant 0 : index
    %0 = vector.load %arg1[%c0, %c0_0] : memref<16x128xbf16, #tpu.memory_space<vmem>>, vector<16x128xbf16>
    %c0_1 = arith.constant 0 : index
    %c0_2 = arith.constant 0 : index
    %1 = vector.load %arg2[%c0_1, %c0_2] : memref<128x128xbf16, #tpu.memory_space<vmem>>, vector<128x128xbf16>
    %cst = arith.constant dense<0.000000e+00> : vector<16x128xf32>
    %2 = tpu.matmul %0, %1, %cst {dimension_numbers = #tpu.dot_dimension_numbers<[1], [0], [0], [1], [0, 0, 1, 1], [], []>} : vector<16x128xbf16>, vector<128x128xbf16>, vector<16x128xf32> -> vector<16x128xf32>
    %c0_3 = arith.constant 0 : index
    %c0_4 = arith.constant 0 : index
    %3 = vector.load %arg3[%c0_3, %c0_4] : memref<16x128xf32, #tpu.memory_space<vmem>>, vector<16x128xf32>
    %4 = arith.addf %2, %3 : vector<16x128xf32>
    %5 = arith.truncf %4 : vector<16x128xf32> to vector<16x128xbf16>
    %c0_5 = arith.constant 0 : index
    %c0_6 = arith.constant 0 : index
    %6 = vector.load %arg4[%c0_5, %c0_6] : memref<16x128xbf16, #tpu.memory_space<vmem>>, vector<16x128xbf16>
    tpu.vector_store %arg4[%c0_5, %c0_6], %5 {strides = array<i32>} : memref<16x128xbf16, #tpu.memory_space<vmem>>, vector<16x128xbf16>,
    return
  }
  func.func @transform_0(%arg0: i32) -> (i32, i32) {
    %c0_i32 = arith.constant 0 : i32
    %c0_i32_0 = arith.constant 0 : i32
    return %arg0, %c0_i32 : i32, i32
  }
  func.func @transform_1(%arg0: i32) -> (i32, i32) {
    %c0_i32 = arith.constant 0 : i32
    %c0_i32_0 = arith.constant 0 : i32
    %c0_i32_1 = arith.constant 0 : i32
    return %c0_i32, %c0_i32_0 : i32, i32
  }
  func.func @transform_2(%arg0: i32) -> (i32, i32) {
    %c0_i32 = arith.constant 0 : i32
    %c0_i32_0 = arith.constant 0 : i32
    %c0_i32_1 = arith.constant 0 : i32
    return %c0_i32, %c0_i32_0 : i32, i32
  }
  func.func @transform_3(%arg0: i32) -> (i32, i32) {
    %c0_i32 = arith.constant 0 : i32
    %c0_i32_0 = arith.constant 0 : i32
    return %arg0, %c0_i32 : i32, i32
  }
}

</mosaic_0001>

<llo_original>
// kernel: tpu_custom_call.1
$region0: #{tpu_custom_call.1}
  #allocation0 [shape = 'u32[]', space=smem, size = 0x4, offset = 0x4, fixed_abs, tag = 'smem constant byte address 0x4 - core index']
  #allocation1 [shape = 'u32[144,128]{1,0:T(1,128)}', space=vmem, size = 0x12000, scoped, tag = 'internal scratch']
  %s0 = inlined_call_operand.hbm [shape: bf16[32,128], index: 0, kind: input, shape index: {}]
  %s1 = inlined_call_operand.hbm [shape: bf16[128,128], index: 1, kind: input, shape index: {}]
  %s2 = inlined_call_operand.hbm [shape: f32[16,128], index: 2, kind: input, shape index: {}]
  %s3 = inlined_call_operand.hbm [shape: bf16[32,128], index: 3, kind: output, shape index: {}]
  %s4 = sld [smem:[#allocation0]]
  $region57: #{tpu_custom_call.1} parent=0
    _
  %s6 = ssub.s32 1, %s4
  %s7 = scalar_select 0, %s6, %s4
  $region1: #{tpu_custom_call.1} parent=0
    #allocation2 [shape = 'u8[8192]{0}', space=vmem, size = 0x2000, scoped, tag = 'input window, operand 0']
    #allocation3 [shape = 's32[2]{0}', space=sflag, size = 0x8, scoped, tag = 'scoped memory for tpu_custom_call.1']
    #allocation4 [shape = 's32[2]{0}', space=sflag, size = 0x8, scoped, tag = 'scoped memory for tpu_custom_call.1']
    #allocation5 [shape = 'u8[32768]{0}', space=vmem, size = 0x8000, scoped, tag = 'input window, operand 1, single buffered']
    #allocation6 [shape = 's32[1]{0}', space=sflag, size = 0x4, scoped, tag = 'scoped memory for tpu_custom_call.1']
    #allocation7 [shape = 'u8[8192]{0}', space=vmem, size = 0x2000, scoped, tag = 'input window, operand 2, single buffered']
    #allocation8 [shape = 'u8[8192]{0}', space=vmem, size = 0x2000, scoped, tag = 'output window, operand 0']
    %8 = vsyncpa [#allocation3], 0
    %s9 = scalar_lea.sflag [#allocation3], 1
    %10 = vsyncpa %s9, 0
    %11 = vsyncpa [#allocation6], 0
    %12 = vsyncpa [#allocation4], 0
    %s13 = scalar_lea.sflag [#allocation4], 1
    %14 = vsyncpa %s13, 0
    loop: start=0, step=1, limit=4
    $region2: #{tpu_custom_call.1} parent=1 // loop_pre_header
      _
    $region3: #{tpu_custom_call.1} parent=1 // loop_header
      %s16 = sphi 0, %s20
      %p17 = scmp.ge.s32.totalorder %s16, 4
      %s26 = sphi 0, %s28
      %s29 = sphi 0, %s26
      %s30 = sphi 0, %s29
      %s46 = sphi 0, %s30
      %s50 = sphi 0, %s50
      %s52 = sphi 0, %s50
      %s53 = sphi 0, %s52
      %s67 = sphi 0, %s53
      %s71 = sphi 0, %s71
      %s73 = sphi 0, %s71
      %s74 = sphi 0, %s73
      %s88 = sphi 0, %s74
      %s94 = sphi 0, %s96
      %s97 = sphi 0, %s94
      %s98 = sphi 0, %s97
      %s114 = sphi 0, %s98
    $region4: #{tpu_custom_call.1} parent=1 // loop_header_branch
      %19 = sbr.rel (%p17) target = $region8
    $region5: #{tpu_custom_call.1} parent=1 // loop_body
      %s21 = ssub.s32 %s16, 1
      %s22 = ssub.s32 %s16, 2
      %s23 = sadd.s32 %s16, 1
      %s24 = ssub.s32 %s16, %s23
      %p25 = scmp.eq.s32.totalorder %s24, 0
      %s27 = sadd.s32 %s26, 1
      %s28 = scalar_select %p25, %s26, %s27
      %p31 = pneg %p25
      %p32 = scmp.eq.s32.totalorder %s16, 1
      %p33 = por %p31, %p32
      %p34 = scmp.ne.s32.totalorder %s26, %s29
      %p35 = scmp.eq.s32.totalorder %s16, 0
      %p36 = por %p34, %p35
      %p37 = scmp.ne.s32.totalorder %s26, %s29
      %p38 = scmp.eq.s32.totalorder %s21, 1
      %p39 = por %p37, %p38
      %p40 = scmp.ne.s32.totalorder %s29, %s30
      %p41 = scmp.eq.s32.totalorder %s21, 0
      %p42 = por %p40, %p41
      %p43 = scmp.ne.s32.totalorder %s29, %s30
      %p44 = scmp.eq.s32.totalorder %s22, 1
      %p45 = por %p43, %p44
      %p47 = scmp.ne.s32.totalorder %s30, %s46
      %p48 = scmp.eq.s32.totalorder %s22, 0
      %p49 = por %p47, %p48
      %s51 = sadd.s32 %s50, 1
      %p54 = scmp.eq.s32.totalorder %s16, 1
      %p55 = scmp.ne.s32.totalorder %s50, %s52
      %p56 = scmp.eq.s32.totalorder %s16, 0
      %p57 = por %p55, %p56
      %p58 = scmp.ne.s32.totalorder %s50, %s52
      %p59 = scmp.eq.s32.totalorder %s21, 1
      %p60 = por %p58, %p59
      %p61 = scmp.ne.s32.totalorder %s52, %s53
      %p62 = scmp.eq.s32.totalorder %s21, 0
      %p63 = por %p61, %p62
      %p64 = scmp.ne.s32.totalorder %s52, %s53
      %p65 = scmp.eq.s32.totalorder %s22, 1
      %p66 = por %p64, %p65
      %p68 = scmp.ne.s32.totalorder %s53, %s67
      %p69 = scmp.eq.s32.totalorder %s22, 0
      %p70 = por %p68, %p69
      %s72 = sadd.s32 %s71, 1
      %p75 = scmp.eq.s32.totalorder %s16, 1
      %p76 = scmp.ne.s32.totalorder %s71, %s73
      %p77 = scmp.eq.s32.totalorder %s16, 0
      %p78 = por %p76, %p77
      %p79 = scmp.ne.s32.totalorder %s71, %s73
      %p80 = scmp.eq.s32.totalorder %s21, 1
      %p81 = por %p79, %p80
      %p82 = scmp.ne.s32.totalorder %s73, %s74
      %p83 = scmp.eq.s32.totalorder %s21, 0
      %p84 = por %p82, %p83
      %p85 = scmp.ne.s32.totalorder %s73, %s74
      %p86 = scmp.eq.s32.totalorder %s22, 1
      %p87 = por %p85, %p86
      %p89 = scmp.ne.s32.totalorder %s74, %s88
      %p90 = scmp.eq.s32.totalorder %s22, 0
      %p91 = por %p89, %p90
      %s92 = ssub.s32 %s16, %s23
      %p93 = scmp.eq.s32.totalorder %s92, 0
      %s95 = sadd.s32 %s94, 1
      %s96 = scalar_select %p93, %s94, %s95
      %p99 = pneg %p93
      %p100 = scmp.eq.s32.totalorder %s16, 1
      %p101 = por %p99, %p100
      %p102 = scmp.ne.s32.totalorder %s94, %s97
      %p103 = scmp.eq.s32.totalorder %s16, 0
      %p104 = por %p102, %p103
      %p105 = scmp.ne.s32.totalorder %s94, %s97
      %p106 = scmp.eq.s32.totalorder %s21, 1
      %p107 = por %p105, %p106
      %p108 = scmp.ne.s32.totalorder %s97, %s98
      %p109 = scmp.eq.s32.totalorder %s21, 0
      %p110 = por %p108, %p109
      %p111 = scmp.ne.s32.totalorder %s97, %s98
      %p112 = scmp.eq.s32.totalorder %s22, 1
      %p113 = por %p111, %p112
      %p115 = scmp.ne.s32.totalorder %s98, %s114
      %p116 = scmp.eq.s32.totalorder %s22, 0
      %p117 = por %p115, %p116
      %p118 = scmp.le.s32.totalorder 1, %s16
      %p119 = scmp.lt.s32.totalorder %s16, 3
      %p120 = pnand %p118, %p119
      %p121 = pneg %p120
      // Predicated region
      $region9: #{tpu_custom_call.1} parent=5 // pred_check
        _
      $region10: #{tpu_custom_call.1} parent=5 // pred_check_branch
        %123 = sbr.rel (%p120) target = $region12
      $region11: #{tpu_custom_call.1} parent=5 // pred_region
        %s124 = ssub.s32 %s16, 1
        // Predicated region
        $region13: #{tpu_custom_call.1} parent=11 // pred_check
          %p125 = pneg %p63
        $region14: #{tpu_custom_call.1} parent=11 // pred_check_branch
          %127 = sbr.rel (%p125) target = $region16
        $region15: #{tpu_custom_call.1} parent=11 // pred_region
          %s129 = ssub.s32 1024, 1024
          %130 = vsyncadd [#allocation6], %s129
          %s131 = sshll.u32 [#allocation5], 4
          %s132 = int_to_ptr.vmem [resolvable:$true] %s131
          %137 = dma.hbm_to_vmem [thread:$0]  %s1, 1024, %s132, [#allocation6], 64, 64, 4
        $region16: #{tpu_custom_call.1} parent=11 // pred_fallthru
          _
        // Predicated region
        $region17: #{tpu_custom_call.1} parent=11 // pred_check
          %p138 = pneg %p84
        $region18: #{tpu_custom_call.1} parent=11 // pred_check_branch
          %140 = sbr.rel (%p138) target = $region20
        $region19: #{tpu_custom_call.1} parent=11 // pred_region
          %s142 = ssub.s32 256, 256
          %143 = vsyncadd [#allocation6], %s142
          %s144 = sshll.u32 [#allocation7], 4
          %s145 = int_to_ptr.vmem [resolvable:$true] %s144
          %150 = dma.hbm_to_vmem [thread:$0]  %s2, 256, %s145, [#allocation6], 128, 128, 8
        $region20: #{tpu_custom_call.1} parent=11 // pred_fallthru
          _
      $region12: #{tpu_custom_call.1} parent=5 // pred_fallthru
        _
      %p151 = scmp.lt.s32.totalorder %s16, 2
      // Predicated region
      $region21: #{tpu_custom_call.1} parent=5 // pred_check
        %p152 = pneg %p151
      $region22: #{tpu_custom_call.1} parent=5 // pred_check_branch
        %154 = sbr.rel (%p152) target = $region24
      $region23: #{tpu_custom_call.1} parent=5 // pred_region
        // Predicated region
        $region25: #{tpu_custom_call.1} parent=23 // pred_check
          %p155 = pneg %p36
        $region26: #{tpu_custom_call.1} parent=23 // pred_check_branch
          %157 = sbr.rel (%p155) target = $region28
        $region27: #{tpu_custom_call.1} parent=23 // pred_region
          %s158 = sand.u32 %s26, 1
          %s159 = scalar_lea.sflag [#allocation3], %s158
          %s160 = sand.u32 %s26, 1
          %s161 = smul.addr %s160, 8
          %s162 = scalar_lea.vmem [#allocation2], %s161
          %s163 = smul.u32 2, %s16
          %s165 = ssub.s32 128, 128
          %166 = vsyncadd %s159, %s165
          %s167 = smul.addr %s163, 64
          %s168 = scalar_lea.hbm %s0, %s167
          %s169 = sshll.u32 %s162, 4
          %s170 = int_to_ptr.vmem [resolvable:$true] %s169
          %175 = dma.hbm_to_vmem [thread:$0]  %s168, 128, %s170, %s159, 64, 64, 4
        $region28: #{tpu_custom_call.1} parent=23 // pred_fallthru
          _
      $region24: #{tpu_custom_call.1} parent=5 // pred_fallthru
        _
      %p176 = scmp.le.s32.totalorder 1, %s16
      %p177 = scmp.lt.s32.totalorder %s16, 3
      %p178 = pnand %p176, %p177
      %p179 = pneg %p178
      // Predicated region
      $region29: #{tpu_custom_call.1} parent=5 // pred_check
        _
      $region30: #{tpu_custom_call.1} parent=5 // pred_check_branch
        %181 = sbr.rel (%p178) target = $region32
      $region31: #{tpu_custom_call.1} parent=5 // pred_region
        %s182 = ssub.s32 %s16, 1
        %s183 = sand.u32 %s29, 1
        %s184 = scalar_lea.sflag [#allocation3], %s183
        %s185 = sand.u32 %s29, 1
        %s186 = smul.addr %s185, 8
        %s187 = scalar_lea.vmem [#allocation2], %s186
        // Predicated region
        $region33: #{tpu_custom_call.1} parent=31 // pred_check
          %p188 = pneg %p42
        $region34: #{tpu_custom_call.1} parent=31 // pred_check_branch
          %190 = sbr.rel (%p188) target = $region36
        $region35: #{tpu_custom_call.1} parent=31 // pred_region
          %191 = dma.done %s184, 128
        $region36: #{tpu_custom_call.1} parent=31 // pred_fallthru
          _
        // Predicated region
        $region37: #{tpu_custom_call.1} parent=31 // pred_check
          %p192 = pneg %p63
        $region38: #{tpu_custom_call.1} parent=31 // pred_check_branch
          %194 = sbr.rel (%p192) target = $region40
        $region39: #{tpu_custom_call.1} parent=31 // pred_region
          %195 = dma.done [#allocation6], 1024
        $region40: #{tpu_custom_call.1} parent=31 // pred_fallthru
          _
        // Predicated region
        $region41: #{tpu_custom_call.1} parent=31 // pred_check
          %p196 = pneg %p84
        $region42: #{tpu_custom_call.1} parent=31 // pred_check_branch
          %198 = sbr.rel (%p196) target = $region44
        $region43: #{tpu_custom_call.1} parent=31 // pred_region
          %199 = dma.done [#allocation6], 256
        $region44: #{tpu_custom_call.1} parent=31 // pred_fallthru
          _
        %s200 = sand.u32 %s29, 1
        %s201 = scalar_lea.sflag [#allocation3], %s200
        %s202 = sand.u32 %s29, 1
        %s203 = smul.addr %s202, 8
        %s204 = scalar_lea.vmem [#allocation2], %s203
        %p205 = pneg %p42
        %p206 = pneg %p39
        %p207 = pneg %p63
        %p208 = pneg %p60
        %p209 = pneg %p84
        %p210 = pneg %p81
        %p211 = pneg %p110
        %p212 = pneg %p107
        %s213 = sand.u32 %s97, 1
        %s214 = scalar_lea.sflag [#allocation4], %s213
        %s215 = sand.u32 %s97, 1
        %s216 = smul.addr %s215, 8
        %s217 = scalar_lea.vmem [#allocation8], %s216
        %s218 = smul.u32 2, %s21
        %s219 = smul.u32 2, %s21
        %v221 = vld [vmem:[%s187] sm:$0xf]
        %v222 = vld [vmem:[%s187 + $0x4] sm:$0xf]
        %v223 = vld [vmem:[#allocation5] sm:$0xf]
        %v224 = vld [vmem:[#allocation5 + $0x4] sm:$0xf]
        %v225 = vld [vmem:[#allocation5 + $0x8] sm:$0xf]
        %v226 = vld [vmem:[#allocation5 + $0xc] sm:$0xf]
        %v227 = vld [vmem:[#allocation5 + $0x10] sm:$0xf]
        %v228 = vld [vmem:[#allocation5 + $0x14] sm:$0xf]
        %v229 = vld [vmem:[#allocation5 + $0x18] sm:$0xf]
        %v230 = vld [vmem:[#allocation5 + $0x1c] sm:$0xf]
        %v231 = vld [vmem:[#allocation5 + $0x20] sm:$0xf]
        %v232 = vld [vmem:[#allocation5 + $0x24] sm:$0xf]
        %v233 = vld [vmem:[#allocation5 + $0x28] sm:$0xf]
        %v234 = vld [vmem:[#allocation5 + $0x2c] sm:$0xf]
        %v235 = vld [vmem:[#allocation5 + $0x30] sm:$0xf]
        %v236 = vld [vmem:[#allocation5 + $0x34] sm:$0xf]
        %v237 = vld [vmem:[#allocation5 + $0x38] sm:$0xf]
        %v238 = vld [vmem:[#allocation5 + $0x3c] sm:$0xf]
        %v239 = vld [vmem:[#allocation7] sm:$0xff]
        %v240 = vld [vmem:[#allocation7 + $0x8] sm:$0xff]
        %v243 = vunpack.c.l.b16 %v221
        %v244 = vunpack.c.l.b16 %v222
        %v245 = vpack.c.b16 %v244, %v243
        %v263 = vunpack.c.l.b16 %v223
        %v264 = vunpack.c.l.b16 %v224
        %v265 = vunpack.c.l.b16 %v225
        %v266 = vunpack.c.l.b16 %v226
        %v267 = vunpack.c.l.b16 %v227
        %v268 = vunpack.c.l.b16 %v228
        %v269 = vunpack.c.l.b16 %v229
        %v270 = vunpack.c.l.b16 %v230
        %v271 = vunpack.c.l.b16 %v231
        %v272 = vunpack.c.l.b16 %v232
        %v273 = vunpack.c.l.b16 %v233
        %v274 = vunpack.c.l.b16 %v234
        %v275 = vunpack.c.l.b16 %v235
        %v276 = vunpack.c.l.b16 %v236
        %v277 = vunpack.c.l.b16 %v237
        %v278 = vunpack.c.l.b16 %v238
        %v279 = vpack.c.b16 %v264, %v263
        %v280 = vpack.c.b16 %v266, %v265
        %v281 = vpack.c.b16 %v268, %v267
        %v282 = vpack.c.b16 %v270, %v269
        %v283 = vpack.c.b16 %v272, %v271
        %v284 = vpack.c.b16 %v274, %v273
        %v285 = vpack.c.b16 %v276, %v275
        %v286 = vpack.c.b16 %v278, %v277
        %295 = vmatprep.subr.bf16.mxu0 0
        %296 = vmatpush1.bf16.msra.mxu0 %v279
        %297 = vmatprep.subr.bf16.mxu0 0
        %298 = vmatpush1.bf16.msra.mxu0 %v280
        %299 = vmatprep.subr.bf16.mxu0 0
        %300 = vmatpush1.bf16.msra.mxu0 %v281
        %301 = vmatprep.subr.bf16.mxu0 0
        %302 = vmatpush1.bf16.msra.mxu0 %v282
        %303 = vmatprep.subr.bf16.mxu0 0
        %304 = vmatpush1.bf16.msra.mxu0 %v283
        %305 = vmatprep.subr.bf16.mxu0 0
        %306 = vmatpush1.bf16.msra.mxu0 %v284
        %307 = vmatprep.subr.bf16.mxu0 0
        %308 = vmatpush1.bf16.msra.mxu0 %v285
        %309 = vmatprep.subr.bf16.mxu0 0
        %310 = vmatpush1.bf16.msra.mxu0 %v286
        %311 = vmatprep.subr.bf16.mxu0 0
        %312 = vmatpush1.bf16.msra.mxu0 0
        %313 = vmatprep.subr.bf16.mxu0 0
        %314 = vmatpush1.bf16.msra.mxu0 0
        %315 = vmatprep.subr.bf16.mxu0 0
        %316 = vmatpush1.bf16.msra.mxu0 0
        %317 = vmatprep.subr.bf16.mxu0 0
        %318 = vmatpush1.bf16.msra.mxu0 0
        %319 = vmatprep.subr.bf16.mxu0 0
        %320 = vmatpush1.bf16.msra.mxu0 0
        %321 = vmatprep.subr.bf16.mxu0 0
        %322 = vmatpush1.bf16.msra.mxu0 0
        %323 = vmatprep.subr.bf16.mxu0 0
        %324 = vmatpush1.bf16.msra.mxu0 0
        %325 = vmatprep.subr.bf16.mxu0 0
        %326 = vmatpush1.bf16.msra.mxu0 0
        %327 = vmatprep.mubr.bf16.mxu0 0
        %328 = vmatmul.mubr.bf16.gmra.mrb[0].mxu0 %v245
        %v329 = vpop.f32.mrb[0].mxu0
        %v330 = vadd.f32 %v239, %v329
        %v331 = vpop.f32.mrb[0].mxu0
        %v332 = vpop.f32.mrb[0].mxu0
        %v333 = vadd.f32 %v240, %v332
        %v334 = vpop.f32.mrb[0].mxu0
        %335 = vdwg.mxu0
        %v336 = vpack.c.bf16 %v333, %v330
        %v338 = vunpack.c.l.b16 %v336
        %v339 = vunpack.c.h.b16 %v336
        %v340 = vpack.c.b16 %v338, %v338
        %v341 = vpack.c.b16 %v339, %v339
        %344 = vst [vmem:[%s217] sm:$0xf] %v340
        %345 = vst [vmem:[%s217 + $0x4] sm:$0xf] %v341
        %s346 = sand.u32 %s97, 1
        %s347 = scalar_lea.sflag [#allocation4], %s346
        %s348 = sand.u32 %s97, 1
        %s349 = smul.addr %s348, 8
        %s350 = scalar_lea.vmem [#allocation8], %s349
        // Predicated region
        $region45: #{tpu_custom_call.1} parent=31 // pred_check
          %p351 = pneg %p107
        $region46: #{tpu_custom_call.1} parent=31 // pred_check_branch
          %353 = sbr.rel (%p351) target = $region48
        $region47: #{tpu_custom_call.1} parent=31 // pred_region
          %s354 = smul.u32 2, %s21
          %s356 = ssub.s32 128, 128
          %357 = vsyncadd %s347, %s356
          %s358 = smul.addr %s354, 64
          %s359 = scalar_lea.hbm %s3, %s358
          %s360 = sshll.u32 %s350, 4
          %s361 = int_to_ptr.vmem [resolvable:$true] %s360
          %366 = dma.vmem_to_hbm [thread:$0]  %s361, 128, %s359, %s347, 64, 64, 4
        $region48: #{tpu_custom_call.1} parent=31 // pred_fallthru
          _
      $region32: #{tpu_custom_call.1} parent=5 // pred_fallthru
        _
      %p367 = scmp.le.s32.totalorder 2, %s16
      // Predicated region
      $region49: #{tpu_custom_call.1} parent=5 // pred_check
        %p368 = pneg %p367
      $region50: #{tpu_custom_call.1} parent=5 // pred_check_branch
        %370 = sbr.rel (%p368) target = $region52
      $region51: #{tpu_custom_call.1} parent=5 // pred_region
        %s371 = ssub.s32 %s16, 2
        // Predicated region
        $region53: #{tpu_custom_call.1} parent=51 // pred_check
          %p372 = pneg %p113
        $region54: #{tpu_custom_call.1} parent=51 // pred_check_branch
          %374 = sbr.rel (%p372) target = $region56
        $region55: #{tpu_custom_call.1} parent=51 // pred_region
          %s375 = sand.u32 %s98, 1
          %s376 = scalar_lea.sflag [#allocation4], %s375
          %s377 = sand.u32 %s98, 1
          %s378 = smul.addr %s377, 8
          %s379 = scalar_lea.vmem [#allocation8], %s378
          %380 = dma.done %s376, 128
        $region56: #{tpu_custom_call.1} parent=51 // pred_fallthru
          _
      $region52: #{tpu_custom_call.1} parent=5 // pred_fallthru
        _
    $region6: #{tpu_custom_call.1} parent=1 // loop_footer
      %s20 = sadd.s32 1, %s16
    $region7: #{tpu_custom_call.1} parent=1 // loop_footer_branch
      %15 = sbr.rel target = $region3
    $region8: #{tpu_custom_call.1} parent=1 // loop_exit
      _
    %381 = vsyncpa [#allocation3], 1
    %s382 = scalar_lea.sflag [#allocation3], 1
    %383 = vsyncpa %s382, 1
    %384 = vsyncpa [#allocation6], 1
    %385 = vsyncpa [#allocation4], 1
    %s386 = scalar_lea.sflag [#allocation4], 1
    %387 = vsyncpa %s386, 1

</llo_original>
